<compile_context>
chip_gen: v7x
topology: tpu7x:2x2x1
jax: 0.10.0
libtpu: 0.0.40
codegen_flags: <defaults>
</compile_context>

<pallas_src>
import functools

import jax
import jax.numpy as jnp
from jax.experimental import pallas as pl
from jax.experimental.pallas import tpu as pltpu

BN_EPS = 1e-5
_SUBLANE = 8
_TARGET_BLOCK_BYTES = 2 * 1024 * 1024   # ~2 MiB per x block -> ~8 MiB live (2x in + 2x out buffers)


def _srm_kernel(x_ref, p_ref, o_ref, *, n_true):
    """Process one (C_TILE, HW) block of one batch element.

    p_ref holds the folded CFC + BatchNorm(eval) constants per channel:
      col 0: a = w_mean * gamma * rsqrt(rv + eps)
      col 1: b = w_std  * gamma * rsqrt(rv + eps)
      col 2: c = beta - rm * gamma * rsqrt(rv + eps)
    gate = sigmoid(a * mean + b * std + c);  out = x * (1 + gate)
    """
    x = x_ref[...]                                              # (C_TILE, HW) f32

    # Two-pass statistics (numerically robust; extra VPU passes are free under
    # the HBM roofline since the block is already resident in VMEM).
    mean = jnp.sum(x, axis=-1, keepdims=True) * (1.0 / n_true)  # (C_TILE, 1)
    d = x - mean
    var = jnp.sum(d * d, axis=-1, keepdims=True) * (1.0 / (n_true - 1.0))
    std = jnp.sqrt(var)                                         # unbiased, matches torch.std

    a = p_ref[:, 0:1]
    b = p_ref[:, 1:2]
    c = p_ref[:, 2:3]
    g = jax.nn.sigmoid(a * mean + b * std + c)                  # (C_TILE, 1)

    o_ref[...] = x * (1.0 + g)                                  # broadcast over HW


def _pick_c_tile(c, hw, itemsize=4):
    """Largest multiple-of-8 divisor of C whose x block stays under the byte target."""
    if c % _SUBLANE != 0:
        return c                                                # full-C block (allowed by BlockSpec rules)
    divisors = [d for d in range(_SUBLANE, c + 1, _SUBLANE) if c % d == 0]
    fitting = [d for d in divisors if d * hw * itemsize <= _TARGET_BLOCK_BYTES]
    return max(fitting) if fitting else min(divisors)


def srm_layer(x_nchw, cfc_w, bn_gamma, bn_beta, bn_rm, bn_rv):
    """x_nchw: (B, C, H, W) float32. Returns (B, C, H, W)."""
    b, c, h, w = x_nchw.shape
    hw = h * w
    x = x_nchw.reshape(b, c, hw).astype(jnp.float32)            # metadata-only reshape

    # Fold CFC (depthwise Conv1d, k=2, groups=C, no bias) + BatchNorm1d (eval)
    # into three per-channel constants -> one small param array instead of five.
    w2 = cfc_w.reshape(c, 2).astype(jnp.float32)
    scale = bn_gamma.reshape(c, 1).astype(jnp.float32) * jax.lax.rsqrt(
        bn_rv.reshape(c, 1).astype(jnp.float32) + BN_EPS
    )
    col_a = w2[:, 0:1] * scale
    col_b = w2[:, 1:2] * scale
    col_c = bn_beta.reshape(c, 1).astype(jnp.float32) - bn_rm.reshape(c, 1).astype(jnp.float32) * scale
    params = jnp.concatenate([col_a, col_b, col_c], axis=-1)    # (C, 3)

    c_tile = _pick_c_tile(c, hw)
    grid = (b, c // c_tile)

    # VMEM budget: in + out blocks, each double-buffered, plus params + slack.
    block_bytes = c_tile * hw * 4
    vmem_limit = min(max(4 * block_bytes + (2 << 20), 16 << 20), 64 << 20)

    out = pl.pallas_call(
        functools.partial(_srm_kernel, n_true=float(hw)),
        out_shape=jax.ShapeDtypeStruct((b, c, hw), jnp.float32),
        grid_spec=pltpu.PrefetchScalarGridSpec(
            num_scalar_prefetch=0,
            grid=grid,
            in_specs=[
                pl.BlockSpec((pl.Squeezed(), c_tile, hw), lambda i, j: (i, j, 0)),
                pl.BlockSpec((c_tile, 3), lambda i, j: (j, 0)),
            ],
            out_specs=pl.BlockSpec((pl.Squeezed(), c_tile, hw), lambda i, j: (i, j, 0)),
        ),
        compiler_params=pltpu.CompilerParams(
            dimension_semantics=("parallel", "parallel"),
            vmem_limit_bytes=vmem_limit,
        ),
    )(x, params)

    return out.reshape(b, c, h, w).astype(x_nchw.dtype)


def _reference(x_nchw, cfc_w, bn_gamma, bn_beta, bn_rm, bn_rv):
    b, c, h, w = x_nchw.shape
    xr = x_nchw.reshape(b, c, -1)
    mean = xr.mean(-1)
    std = jnp.sqrt(jnp.sum((xr - mean[..., None]) ** 2, -1) / (h * w - 1))
    wz = cfc_w.reshape(c, 2)
    z = wz[None, :, 0] * mean + wz[None, :, 1] * std
    zbn = (z - bn_rm[None]) / jnp.sqrt(bn_rv[None] + BN_EPS) * bn_gamma[None] + bn_beta[None]
    g = jax.nn.sigmoid(zbn)[:, :, None, None]
    return x_nchw + x_nchw * g


if __name__ == "__main__":
    key = jax.random.PRNGKey(0)
    kx, kw = jax.random.split(key)

    B, C, H, W = 2, 4, 16, 16
    x = jax.random.normal(kx, (B, C, H, W), dtype=jnp.float32)

    # Parameters (shapes from SRMLayer.__init__, deterministic init):
    #   cfc: Conv1d(C, C, kernel_size=2, groups=C, bias=False) -> weight (C, 1, 2)
    #   bn : BatchNorm1d(C) -> gamma=1, beta=0, running_mean=0, running_var=1
    cfc_w = jax.random.normal(kw, (C, 1, 2), dtype=jnp.float32) * 0.5
    bn_gamma = jnp.ones((C,), dtype=jnp.float32)
    bn_beta = jnp.zeros((C,), dtype=jnp.float32)
    bn_rm = jnp.zeros((C,), dtype=jnp.float32)
    bn_rv = jnp.ones((C,), dtype=jnp.float32)

    out = srm_layer(x, cfc_w, bn_gamma, bn_beta, bn_rm, bn_rv)
    out = jax.block_until_ready(out)

    ref = _reference(x, cfc_w, bn_gamma, bn_beta, bn_rm, bn_rv)
    assert out.shape == (B, C, H, W)
    assert jnp.allclose(out, ref, atol=1e-5, rtol=1e-5)

    print("KERNEL_OK")
</pallas_src>

<mosaic_0001>
module attributes {stable_mosaic.version = 11 : i64} {
  func.func @_srm_kernel(%arg0: i32, %arg1: i32, %arg2: memref<1x4x256xf32, #tpu.memory_space<vmem>>, %arg3: memref<4x3xf32, #tpu.memory_space<vmem>>, %arg4: memref<1x4x256xf32, #tpu.memory_space<vmem>>) attributes {dimension_semantics = [#tpu.dimension_semantics<parallel>, #tpu.dimension_semantics<parallel>], iteration_bounds = array<i64: 2, 1>, scalar_prefetch = 0 : i64, scratch_operands = 0 : i64, tpu.core_type = #tpu.core_type<tc>, window_params = [{transform_indices = @transform_0, window_bounds = array<i64: 1, 4, 256>}, {transform_indices = @transform_1, window_bounds = array<i64: 4, 3>}, {transform_indices = @transform_2, window_bounds = array<i64: 1, 4, 256>}]} {
    %c0 = arith.constant 0 : index
    %c0_0 = arith.constant 0 : index
    %c0_1 = arith.constant 0 : index
    %0 = vector.load %arg2[%c0, %c0_0, %c0_1] : memref<1x4x256xf32, #tpu.memory_space<vmem>>, vector<1x4x256xf32>
    %1 = vector.shape_cast %0 : vector<1x4x256xf32> to vector<4x256xf32>
    %cst = arith.constant dense<0.000000e+00> : vector<4xf32>
    %2 = vector.multi_reduction <add>, %1, %cst [1] : vector<4x256xf32> to vector<4xf32>
    %3 = vector.shape_cast %2 : vector<4xf32> to vector<4x1xf32>
    %cst_2 = arith.constant 3.906250e-03 : f32
    %4 = vector.broadcast %cst_2 : f32 to vector<4x1xf32>
    %5 = arith.mulf %3, %4 : vector<4x1xf32>
    %6 = vector.broadcast %5 : vector<4x1xf32> to vector<4x256xf32>
    %7 = arith.subf %1, %6 : vector<4x256xf32>
    %8 = arith.mulf %7, %7 : vector<4x256xf32>
    %cst_3 = arith.constant dense<0.000000e+00> : vector<4xf32>
    %9 = vector.multi_reduction <add>, %8, %cst_3 [1] : vector<4x256xf32> to vector<4xf32>
    %10 = vector.shape_cast %9 : vector<4xf32> to vector<4x1xf32>
    %cst_4 = arith.constant 0.00392156886 : f32
    %11 = vector.broadcast %cst_4 : f32 to vector<4x1xf32>
    %12 = arith.mulf %10, %11 : vector<4x1xf32>
    %13 = math.sqrt %12 : vector<4x1xf32>
    %c0_5 = arith.constant 0 : index
    %c0_6 = arith.constant 0 : index
    %14 = vector.load %arg3[%c0_5, %c0_6] : memref<4x3xf32, #tpu.memory_space<vmem>>, vector<4x1xf32>
    %c0_7 = arith.constant 0 : index
    %c1 = arith.constant 1 : index
    %15 = vector.load %arg3[%c0_7, %c1] : memref<4x3xf32, #tpu.memory_space<vmem>>, vector<4x1xf32>
    %c0_8 = arith.constant 0 : index
    %c2 = arith.constant 2 : index
    %16 = vector.load %arg3[%c0_8, %c2] : memref<4x3xf32, #tpu.memory_space<vmem>>, vector<4x1xf32>
    %17 = arith.mulf %14, %5 : vector<4x1xf32>
    %18 = arith.mulf %15, %13 : vector<4x1xf32>
    %19 = arith.addf %17, %18 : vector<4x1xf32>
    %20 = arith.addf %19, %16 : vector<4x1xf32>
    %21 = arith.negf %20 : vector<4x1xf32>
    %22 = math.exp %21 : vector<4x1xf32>
    %cst_9 = arith.constant 1.000000e+00 : f32
    %23 = vector.broadcast %cst_9 : f32 to vector<4x1xf32>
    %24 = arith.addf %23, %22 : vector<4x1xf32>
    %25 = arith.divf %23, %24 : vector<4x1xf32>
    %cst_10 = arith.constant 1.000000e+00 : f32
    %26 = vector.broadcast %cst_10 : f32 to vector<4x1xf32>
    %27 = arith.addf %26, %25 : vector<4x1xf32>
    %28 = vector.broadcast %27 : vector<4x1xf32> to vector<4x256xf32>
    %29 = arith.mulf %1, %28 : vector<4x256xf32>
    %c0_11 = arith.constant 0 : index
    %c0_12 = arith.constant 0 : index
    %c0_13 = arith.constant 0 : index
    %30 = vector.load %arg4[%c0_11, %c0_12, %c0_13] : memref<1x4x256xf32, #tpu.memory_space<vmem>>, vector<1x4x256xf32>
    %31 = vector.shape_cast %30 : vector<1x4x256xf32> to vector<4x256xf32>
    %32 = vector.shape_cast %29 : vector<4x256xf32> to vector<1x4x256xf32>
    tpu.vector_store %arg4[%c0_11, %c0_12, %c0_13], %32 {strides = array<i32>} : memref<1x4x256xf32, #tpu.memory_space<vmem>>, vector<1x4x256xf32>,
    return
  }
  func.func @transform_0(%arg0: i32, %arg1: i32) -> (i32, i32, i32) {
    %c0_i32 = arith.constant 0 : i32
    %c0_i32_0 = arith.constant 0 : i32
    return %arg0, %arg1, %c0_i32 : i32, i32, i32
  }
  func.func @transform_1(%arg0: i32, %arg1: i32) -> (i32, i32) {
    %c0_i32 = arith.constant 0 : i32
    %c0_i32_0 = arith.constant 0 : i32
    return %arg1, %c0_i32 : i32, i32
  }
  func.func @transform_2(%arg0: i32, %arg1: i32) -> (i32, i32, i32) {
    %c0_i32 = arith.constant 0 : i32
    %c0_i32_0 = arith.constant 0 : i32
    return %arg0, %arg1, %c0_i32 : i32, i32, i32
  }
}

</mosaic_0001>

<llo_original>
// kernel: tpu_custom_call.1
$region0: #{tpu_custom_call.1}
  #allocation0 [shape = 'u32[]', space=smem, size = 0x4, offset = 0x4, fixed_abs, tag = 'smem constant byte address 0x4 - core index']
  #allocation1 [shape = 'u32[144,128]{1,0:T(1,128)}', space=vmem, size = 0x12000, scoped, tag = 'internal scratch']
  %s0 = inlined_call_operand.hbm [shape: f32[2,4,256], index: 0, kind: input, shape index: {}]
  %s1 = inlined_call_operand.hbm [shape: f32[4,3], index: 1, kind: input, shape index: {}]
  %s2 = inlined_call_operand.hbm [shape: f32[2,4,256], index: 2, kind: output, shape index: {}]
  %s3 = sld [smem:[#allocation0]]
  $region49: #{tpu_custom_call.1} parent=0
    _
  %s5 = ssub.s32 1, %s3
  %s6 = scalar_select 0, %s5, %s3
  $region1: #{tpu_custom_call.1} parent=0
    #allocation2 [shape = 'u8[8192]{0}', space=vmem, size = 0x2000, scoped, tag = 'input window, operand 0']
    #allocation3 [shape = 's32[2]{0}', space=sflag, size = 0x8, scoped, tag = 'scoped memory for tpu_custom_call.1']
    #allocation4 [shape = 's32[2]{0}', space=sflag, size = 0x8, scoped, tag = 'scoped memory for tpu_custom_call.1']
    #allocation5 [shape = 'u8[2048]{0}', space=vmem, size = 0x800, scoped, tag = 'input window, operand 1, single buffered']
    #allocation6 [shape = 's32[1]{0}', space=sflag, size = 0x4, scoped, tag = 'scoped memory for tpu_custom_call.1']
    #allocation7 [shape = 'u8[8192]{0}', space=vmem, size = 0x2000, scoped, tag = 'output window, operand 0']
    %7 = vsyncpa [#allocation3], 0
    %s8 = scalar_lea.sflag [#allocation3], 1
    %9 = vsyncpa %s8, 0
    %10 = vsyncpa [#allocation6], 0
    %11 = vsyncpa [#allocation4], 0
    %s12 = scalar_lea.sflag [#allocation4], 1
    %13 = vsyncpa %s12, 0
    loop: start=0, step=1, limit=4
    $region2: #{tpu_custom_call.1} parent=1 // loop_pre_header
      _
    $region3: #{tpu_custom_call.1} parent=1 // loop_header
      %s15 = sphi 0, %s19
      %p16 = scmp.ge.s32.totalorder %s15, 4
      %s22 = sphi 0, %s34
      %s23 = sphi 0, %s30
      %s24 = sphi 0, %s22
      %s25 = sphi 0, %s23
      %s26 = sphi 0, %s24
      %s27 = sphi 0, %s25
      %s39 = sphi 0, %s41
      %s42 = sphi 0, %s39
      %s43 = sphi 0, %s42
      %s59 = sphi 0, %s43
      %s65 = sphi 0, %s67
      %s68 = sphi 0, %s65
      %s69 = sphi 0, %s68
      %s85 = sphi 0, %s69
      %s93 = sphi 0, %s95
      %s96 = sphi 0, %s93
      %s97 = sphi 0, %s96
      %s113 = sphi 0, %s97
    $region4: #{tpu_custom_call.1} parent=1 // loop_header_branch
      %18 = sbr.rel (%p16) target = $region8
    $region5: #{tpu_custom_call.1} parent=1 // loop_body
      %s20 = ssub.s32 %s15, 1
      %s21 = ssub.s32 %s15, 2
      %s28 = sadd.s32 1, %s23
      %p29 = scmp.ge.s32.totalorder %s28, 1
      %s30 = scalar_select %p29, 0, %s28
      %s31 = sadd.s32 1, %s22
      %s32 = scalar_select %p29, %s31, %s22
      %p33 = scmp.ge.s32.totalorder %s32, 2
      %s34 = scalar_select %p33, 0, %s32
      %s35 = ssub.s32 %s22, %s34
      %s36 = ssub.s32 %s23, %s30
      %s37 = sor.u32 %s35, %s36
      %p38 = scmp.eq.s32.totalorder %s37, 0
      %s40 = sadd.s32 %s39, 1
      %s41 = scalar_select %p38, %s39, %s40
      %p44 = pneg %p38
      %p45 = scmp.eq.s32.totalorder %s15, 1
      %p46 = por %p44, %p45
      %p47 = scmp.ne.s32.totalorder %s39, %s42
      %p48 = scmp.eq.s32.totalorder %s15, 0
      %p49 = por %p47, %p48
      %p50 = scmp.ne.s32.totalorder %s39, %s42
      %p51 = scmp.eq.s32.totalorder %s20, 1
      %p52 = por %p50, %p51
      %p53 = scmp.ne.s32.totalorder %s42, %s43
      %p54 = scmp.eq.s32.totalorder %s20, 0
      %p55 = por %p53, %p54
      %p56 = scmp.ne.s32.totalorder %s42, %s43
      %p57 = scmp.eq.s32.totalorder %s21, 1
      %p58 = por %p56, %p57
      %p60 = scmp.ne.s32.totalorder %s43, %s59
      %p61 = scmp.eq.s32.totalorder %s21, 0
      %p62 = por %p60, %p61
      %s63 = ssub.s32 %s23, %s30
      %p64 = scmp.eq.s32.totalorder %s63, 0
      %s66 = sadd.s32 %s65, 1
      %s67 = scalar_select %p64, %s65, %s66
      %p70 = pneg %p64
      %p71 = scmp.eq.s32.totalorder %s15, 1
      %p72 = por %p70, %p71
      %p73 = scmp.ne.s32.totalorder %s65, %s68
      %p74 = scmp.eq.s32.totalorder %s15, 0
      %p75 = por %p73, %p74
      %p76 = scmp.ne.s32.totalorder %s65, %s68
      %p77 = scmp.eq.s32.totalorder %s20, 1
      %p78 = por %p76, %p77
      %p79 = scmp.ne.s32.totalorder %s68, %s69
      %p80 = scmp.eq.s32.totalorder %s20, 0
      %p81 = por %p79, %p80
      %p82 = scmp.ne.s32.totalorder %s68, %s69
      %p83 = scmp.eq.s32.totalorder %s21, 1
      %p84 = por %p82, %p83
      %p86 = scmp.ne.s32.totalorder %s69, %s85
      %p87 = scmp.eq.s32.totalorder %s21, 0
      %p88 = por %p86, %p87
      %s89 = ssub.s32 %s22, %s34
      %s90 = ssub.s32 %s23, %s30
      %s91 = sor.u32 %s89, %s90
      %p92 = scmp.eq.s32.totalorder %s91, 0
      %s94 = sadd.s32 %s93, 1
      %s95 = scalar_select %p92, %s93, %s94
      %p98 = pneg %p92
      %p99 = scmp.eq.s32.totalorder %s15, 1
      %p100 = por %p98, %p99
      %p101 = scmp.ne.s32.totalorder %s93, %s96
      %p102 = scmp.eq.s32.totalorder %s15, 0
      %p103 = por %p101, %p102
      %p104 = scmp.ne.s32.totalorder %s93, %s96
      %p105 = scmp.eq.s32.totalorder %s20, 1
      %p106 = por %p104, %p105
      %p107 = scmp.ne.s32.totalorder %s96, %s97
      %p108 = scmp.eq.s32.totalorder %s20, 0
      %p109 = por %p107, %p108
      %p110 = scmp.ne.s32.totalorder %s96, %s97
      %p111 = scmp.eq.s32.totalorder %s21, 1
      %p112 = por %p110, %p111
      %p114 = scmp.ne.s32.totalorder %s97, %s113
      %p115 = scmp.eq.s32.totalorder %s21, 0
      %p116 = por %p114, %p115
      %p117 = scmp.le.s32.totalorder 1, %s15
      %p118 = scmp.lt.s32.totalorder %s15, 3
      %p119 = pnand %p117, %p118
      %p120 = pneg %p119
      // Predicated region
      $region9: #{tpu_custom_call.1} parent=5 // pred_check
        _
      $region10: #{tpu_custom_call.1} parent=5 // pred_check_branch
        %122 = sbr.rel (%p119) target = $region12
      $region11: #{tpu_custom_call.1} parent=5 // pred_region
        %s123 = ssub.s32 %s15, 1
        // Predicated region
        $region13: #{tpu_custom_call.1} parent=11 // pred_check
          %p124 = pneg %p81
        $region14: #{tpu_custom_call.1} parent=11 // pred_check_branch
          %126 = sbr.rel (%p124) target = $region16
        $region15: #{tpu_custom_call.1} parent=11 // pred_region
          %s128 = ssub.s32 64, 64
          %129 = vsyncadd [#allocation6], %s128
          %s130 = smul.addr %s25, 64
          %s131 = scalar_lea.hbm %s1, %s130
          %s133 = sshll.u32 [#allocation5], 4
          %s134 = int_to_ptr.vmem [resolvable:$true] %s133
          %136 = dma.hbm_to_vmem [thread:$0]  %s131, 64, %s134, [#allocation6]
        $region16: #{tpu_custom_call.1} parent=11 // pred_fallthru
          _
      $region12: #{tpu_custom_call.1} parent=5 // pred_fallthru
        _
      %p137 = scmp.lt.s32.totalorder %s15, 2
      // Predicated region
      $region17: #{tpu_custom_call.1} parent=5 // pred_check
        %p138 = pneg %p137
      $region18: #{tpu_custom_call.1} parent=5 // pred_check_branch
        %140 = sbr.rel (%p138) target = $region20
      $region19: #{tpu_custom_call.1} parent=5 // pred_region
        // Predicated region
        $region21: #{tpu_custom_call.1} parent=19 // pred_check
          %p141 = pneg %p49
        $region22: #{tpu_custom_call.1} parent=19 // pred_check_branch
          %143 = sbr.rel (%p141) target = $region24
        $region23: #{tpu_custom_call.1} parent=19 // pred_region
          %s144 = sand.u32 %s39, 1
          %s145 = scalar_lea.sflag [#allocation3], %s144
          %s146 = sand.u32 %s39, 1
          %s147 = smul.addr %s146, 8
          %s148 = scalar_lea.vmem [#allocation2], %s147
          %s150 = ssub.s32 128, 128
          %151 = vsyncadd %s145, %s150
          %s152 = smul.addr %s23, 2
          %s153 = smul.addr %s22, 2
          %s154 = sadd.s32 %s152, %s153
          %s155 = smul.addr %s154, 64
          %s156 = scalar_lea.hbm %s0, %s155
          %s158 = sshll.u32 %s148, 4
          %s159 = int_to_ptr.vmem [resolvable:$true] %s158
          %161 = dma.hbm_to_vmem [thread:$0]  %s156, 128, %s159, %s145
        $region24: #{tpu_custom_call.1} parent=19 // pred_fallthru
          _
      $region20: #{tpu_custom_call.1} parent=5 // pred_fallthru
        _
      %p162 = scmp.le.s32.totalorder 1, %s15
      %p163 = scmp.lt.s32.totalorder %s15, 3
      %p164 = pnand %p162, %p163
      %p165 = pneg %p164
      // Predicated region
      $region25: #{tpu_custom_call.1} parent=5 // pred_check
        _
      $region26: #{tpu_custom_call.1} parent=5 // pred_check_branch
        %167 = sbr.rel (%p164) target = $region28
      $region27: #{tpu_custom_call.1} parent=5 // pred_region
        %s168 = ssub.s32 %s15, 1
        %s169 = sand.u32 %s42, 1
        %s170 = scalar_lea.sflag [#allocation3], %s169
        %s171 = sand.u32 %s42, 1
        %s172 = smul.addr %s171, 8
        %s173 = scalar_lea.vmem [#allocation2], %s172
        // Predicated region
        $region29: #{tpu_custom_call.1} parent=27 // pred_check
          %p174 = pneg %p55
        $region30: #{tpu_custom_call.1} parent=27 // pred_check_branch
          %176 = sbr.rel (%p174) target = $region32
        $region31: #{tpu_custom_call.1} parent=27 // pred_region
          %177 = dma.done %s170, 128
        $region32: #{tpu_custom_call.1} parent=27 // pred_fallthru
          _
        // Predicated region
        $region33: #{tpu_custom_call.1} parent=27 // pred_check
          %p178 = pneg %p81
        $region34: #{tpu_custom_call.1} parent=27 // pred_check_branch
          %180 = sbr.rel (%p178) target = $region36
        $region35: #{tpu_custom_call.1} parent=27 // pred_region
          %181 = dma.done [#allocation6], 64
        $region36: #{tpu_custom_call.1} parent=27 // pred_fallthru
          _
        %s182 = sand.u32 %s42, 1
        %s183 = scalar_lea.sflag [#allocation3], %s182
        %s184 = sand.u32 %s42, 1
        %s185 = smul.addr %s184, 8
        %s186 = scalar_lea.vmem [#allocation2], %s185
        %p187 = pneg %p55
        %p188 = pneg %p52
        %p189 = pneg %p81
        %p190 = pneg %p78
        %p191 = pneg %p109
        %p192 = pneg %p106
        %s193 = sand.u32 %s96, 1
        %s194 = scalar_lea.sflag [#allocation4], %s193
        %s195 = sand.u32 %s96, 1
        %s196 = smul.addr %s195, 8
        %s197 = scalar_lea.vmem [#allocation7], %s196
        %v198 = vld [vmem:[%s173] sm:$0xff]
        %v200 = vcombine.high %v198, %v198
        %vm202 = vcmask 1043456
        %v203 = vsel %vm202, %v198, 0.0
        %v204 = vsel %vm202, %v200, 0.0
        %v205 = vadd.f32 %v203, %v204
        %206 = vadd.xlane.f32.xlu0 %v205
        %v207 = vpop.xlane.xlu0 %206
        %v208 = vmul.f32 %v207, 0.00390625
        %v211 = vunpack.c.l.s4 839922192
        %v212 = vunpack.c.0.s8 %v211
        %v213 = vlaneseq
        %v214 = vshrl.u32 %v213, 7
        %v215 = vsub.s32 %v212, %v214
        %v216 = vrot.slane %v208, %v215
        %v218 = vsub.f32 %v198, %v216
        %v219 = vmul.f32 %v218, %v218
        %v221 = vcombine.high %v219, %v219
        %v223 = vsel %vm202, %v219, 0.0
        %v224 = vsel %vm202, %v221, 0.0
        %v225 = vadd.f32 %v223, %v224
        %226 = vadd.xlane.f32.xlu0 %v225
        %v227 = vpop.xlane.xlu0 %226
        %v228 = vmul.f32 %v227, 0.003921569
        %v229 = vrsqrt.pop %v228
        %v230 = vmul.f32 %v228, %v229
        %vm231 = vcmp.eq.f32.partialorder %v228, inf
        %v232 = vsel %vm231, %v228, %v230
        %vm233 = vcmp.eq.f32.partialorder %v228, 0.0
        %v234 = vand.u32 %v228, 2147483648
        %v235 = vsel %vm233, %v234, %v232
        %v236 = vld [vmem:[#allocation5] sm:$0xf]
        %v237 = vmul.f32 %v236, %v208
        %v238 = vmul.f32 %v236, %v235
        %240 = vrot.lane.b32.xlu0 %v238, 127
        %v241 = vpop.permute.xlu0 %240
        %v243 = vadd.f32 %v237, %v241
        %245 = vrot.lane.b32.xlu0 %v236, 126
        %v246 = vpop.permute.xlu0 %245
        %v248 = vadd.f32 %v243, %v246
        %v249 = vxor.u32 %v248, 2147483648
        %v250 = vmul.f32 %v249, 1.442695
        %v251 = vpow.pop %v250
        %v252 = vadd.f32 %v251, 1.0
        %v253 = vrcp.pop %v252
        %v254 = vmul.f32 1.0, %v253
        %v255 = vadd.f32 %v254, 1.0
        %257 = vset.pattern.permute.xlu0 0
        %258 = vperm.xlu0 %257, %v255
        %v259 = vpop.permute.xlu0 %258
        %v261 = vunpack.c.l.s4 839922192
        %v262 = vunpack.c.0.s8 %v261
        %v263 = vlaneseq
        %v264 = vshrl.u32 %v263, 7
        %v265 = vsub.s32 %v262, %v264
        %v266 = vrot.slane %v259, %v265
        %v268 = vmul.f32 %v198, %v266
        %269 = vst [vmem:[%s197] sm:$0xff] %v268
        %s270 = sand.u32 %s96, 1
        %s271 = scalar_lea.sflag [#allocation4], %s270
        %s272 = sand.u32 %s96, 1
        %s273 = smul.addr %s272, 8
        %s274 = scalar_lea.vmem [#allocation7], %s273
        // Predicated region
        $region37: #{tpu_custom_call.1} parent=27 // pred_check
          %p275 = pneg %p106
        $region38: #{tpu_custom_call.1} parent=27 // pred_check_branch
          %277 = sbr.rel (%p275) target = $region40
        $region39: #{tpu_custom_call.1} parent=27 // pred_region
          %s279 = ssub.s32 128, 128
          %280 = vsyncadd %s271, %s279
          %s281 = smul.addr %s25, 2
          %s282 = smul.addr %s24, 2
          %s283 = sadd.s32 %s281, %s282
          %s284 = smul.addr %s283, 64
          %s285 = scalar_lea.hbm %s2, %s284
          %s287 = sshll.u32 %s274, 4
          %s288 = int_to_ptr.vmem [resolvable:$true] %s287
          %290 = dma.vmem_to_hbm [thread:$0]  %s288, 128, %s285, %s271
        $region40: #{tpu_custom_call.1} parent=27 // pred_fallthru
          _
      $region28: #{tpu_custom_call.1} parent=5 // pred_fallthru
        _
      %p291 = scmp.le.s32.totalorder 2, %s15
      // Predicated region
      $region41: #{tpu_custom_call.1} parent=5 // pred_check
        %p292 = pneg %p291
      $region42: #{tpu_custom_call.1} parent=5 // pred_check_branch
        %294 = sbr.rel (%p292) target = $region44
      $region43: #{tpu_custom_call.1} parent=5 // pred_region
        %s295 = ssub.s32 %s15, 2
        // Predicated region
        $region45: #{tpu_custom_call.1} parent=43 // pred_check
          %p296 = pneg %p112
        $region46: #{tpu_custom_call.1} parent=43 // pred_check_branch
          %298 = sbr.rel (%p296) target = $region48
        $region47: #{tpu_custom_call.1} parent=43 // pred_region
          %s299 = sand.u32 %s97, 1
          %s300 = scalar_lea.sflag [#allocation4], %s299
          %s301 = sand.u32 %s97, 1
          %s302 = smul.addr %s301, 8
          %s303 = scalar_lea.vmem [#allocation7], %s302
          %304 = dma.done %s300, 128
        $region48: #{tpu_custom_call.1} parent=43 // pred_fallthru
          _
      $region44: #{tpu_custom_call.1} parent=5 // pred_fallthru
        _
    $region6: #{tpu_custom_call.1} parent=1 // loop_footer
      %s19 = sadd.s32 1, %s15
    $region7: #{tpu_custom_call.1} parent=1 // loop_footer_branch
      %14 = sbr.rel target = $region3
    $region8: #{tpu_custom_call.1} parent=1 // loop_exit
      _
    %305 = vsyncpa [#allocation3], 1
    %s306 = scalar_lea.sflag [#allocation3], 1
    %307 = vsyncpa %s306, 1
    %308 = vsyncpa [#allocation6], 1
    %309 = vsyncpa [#allocation4], 1
    %s310 = scalar_lea.sflag [#allocation4], 1
    %311 = vsyncpa %s310, 1

</llo_original>
